<compile_context>
chip_gen: v7x
topology: tpu7x:2x2x1
jax: 0.10.0
libtpu: 0.0.40
codegen_flags: <defaults>
</compile_context>

<pallas_src>
import jax
import jax.numpy as jnp
from jax.experimental import pallas as pl
from jax.experimental.pallas import tpu as pltpu


def _round_up(x, m):
    return ((x + m - 1) // m) * m


def _tpu_budget():
    """Returns (physical VMEM cap, requested scoped limit, #tensorcores)."""
    try:
        cap = int(pltpu.get_tpu_info().vmem_capacity_bytes)
    except Exception:
        cap = 64 * 1024 * 1024  # conservative fallback
    if cap <= 64 * 1024 * 1024:
        # v7x-like: 64 MiB physical per TC, 2 TCs/chip -> stay well below 64 MiB.
        return cap, min(cap, 48 * 1024 * 1024), 2
    # v5e / v6e: 128 MiB physical, single TC -> raise the scoped limit.
    return cap, min(cap - 16 * 1024 * 1024, 96 * 1024 * 1024), 1


def _make_spatial_kernel(eps):
    def kernel(x_ref, o_ref):
        x = x_ref[...]                                     # (1, C, T)
        xf = x.astype(jnp.float32)
        sq = jnp.sum(xf * xf, axis=1, keepdims=True)       # (1, 1, T) f32
        inv = pl.reciprocal(jnp.sqrt(sq) + eps, approx=False)
        # Scale in f32 (free: kernel is HBM-bound), then cast once to output dtype.
        o_ref[...] = (xf * inv).astype(o_ref.dtype)
    return kernel


def _make_rowwise_kernel(eps):
    def kernel(x_ref, o_ref):
        x = x_ref[...]                                     # (TB, C)
        xf = x.astype(jnp.float32)
        sq = jnp.sum(xf * xf, axis=-1, keepdims=True)      # (TB, 1) f32
        inv = pl.reciprocal(jnp.sqrt(sq) + eps, approx=False)
        o_ref[...] = (xf * inv).astype(o_ref.dtype)
    return kernel


def _choose_spatial_tile(HW, C, itemsize, B, per_buf_budget, num_cores):
    """Pick lane tile T for blocks of shape (1, C, T)."""
    sub = max(8, 32 // itemsize)
    C_pad = _round_up(C, sub)
    col128_bytes = C_pad * 128 * itemsize        # per-buffer bytes per 128 lanes
    HW_pad = _round_up(HW, 128)

    lanes128_fit = max(1, per_buf_budget // col128_bytes)
    T = min(128 * lanes128_fit, HW_pad)
    if T >= HW_pad:
        T = HW                                   # one full contiguous row per block

    # v7x: keep both TensorCores busy on this mem-bound kernel.
    if num_cores > 1 and HW > 128:
        need = 2 * num_cores

        def nsteps(t):
            return 1 if t >= HW else -(-HW // t)

        while B * nsteps(T) < need:
            if T >= HW:
                T = max(128, ((HW_pad // 2) // 128) * 128)
            elif T > 128:
                T = max(128, ((T // 2) // 128) * 128)
            else:
                break

    buf_bytes = C_pad * _round_up(min(T, HW_pad), 128) * itemsize
    return T, buf_bytes


def _choose_row_tile(B, C, itemsize, per_buf_budget, num_cores):
    """Pick row tile TB for blocks of shape (TB, C) (descriptor layout)."""
    sub = max(8, 32 // itemsize)
    C_pad = _round_up(C, 128)
    row_bytes = sub * C_pad * itemsize           # per-buffer bytes per `sub` rows

    rows_fit = max(1, per_buf_budget // row_bytes)
    TB = sub * rows_fit
    if num_cores > 1 and B >= 2 * num_cores * sub:
        TB = min(TB, _round_up(-(-B // (2 * num_cores)), sub))
    if TB >= B:
        TB = B                                   # full dim: no masked edge rows
    buf_bytes = _round_up(TB, sub) * C_pad * itemsize
    return TB, buf_bytes


def l2n_pallas(x, eps=1e-6):
    """L2-normalize over dim=1 (matches cirtorch L2N / LF.l2n)."""
    if x.ndim < 2:
        raise ValueError("l2n_pallas expects at least 2 dims (N, C, ...)")
    orig_shape = x.shape
    B, C = int(orig_shape[0]), int(orig_shape[1])
    HW = 1
    for d in orig_shape[2:]:
        HW *= int(d)

    itemsize = jnp.dtype(x.dtype).itemsize
    cap, vmem_limit, num_cores = _tpu_budget()
    # ~70% of the scoped limit spread across 4 live buffers (in+out, 2-deep).
    per_buf_budget = (7 * vmem_limit) // (10 * 4)

    if HW == 1:
        # Descriptor layout: (B, C), C on lanes, reduce over lanes.
        x2 = x.reshape(B, C)
        TB, buf_bytes = _choose_row_tile(B, C, itemsize, per_buf_budget, num_cores)
        vmem_limit = min(cap, max(vmem_limit, 4 * buf_bytes + (4 << 20)))
        out = pl.pallas_call(
            _make_rowwise_kernel(eps),
            out_shape=jax.ShapeDtypeStruct((B, C), x.dtype),
            grid_spec=pltpu.PrefetchScalarGridSpec(
                num_scalar_prefetch=0,
                grid=(pl.cdiv(B, TB),),
                in_specs=[pl.BlockSpec((TB, C), lambda i: (i, 0))],
                out_specs=pl.BlockSpec((TB, C), lambda i: (i, 0)),
            ),
            compiler_params=pltpu.CompilerParams(
                dimension_semantics=("parallel",),
                vmem_limit_bytes=int(vmem_limit),
            ),
        )(x2)
        return out.reshape(orig_shape)

    # Spatial layout: (B, C, HW), HW on lanes, reduce over C (sublanes).
    x3 = x.reshape(B, C, HW)
    T, buf_bytes = _choose_spatial_tile(HW, C, itemsize, B, per_buf_budget, num_cores)
    vmem_limit = min(cap, max(vmem_limit, 4 * buf_bytes + (4 << 20)))
    n_lane_steps = 1 if T >= HW else pl.cdiv(HW, T)

    out = pl.pallas_call(
        _make_spatial_kernel(eps),
        out_shape=jax.ShapeDtypeStruct((B, C, HW), x.dtype),
        grid_spec=pltpu.PrefetchScalarGridSpec(
            num_scalar_prefetch=0,
            grid=(B, n_lane_steps),
            in_specs=[pl.BlockSpec((1, C, T), lambda b, t: (b, 0, t))],
            out_specs=pl.BlockSpec((1, C, T), lambda b, t: (b, 0, t)),
        ),
        compiler_params=pltpu.CompilerParams(
            dimension_semantics=("parallel", "parallel"),
            vmem_limit_bytes=int(vmem_limit),
        ),
    )(x3)
    return out.reshape(orig_shape)


def l2n_reference(x, eps=1e-6):
    xf = x.astype(jnp.float32)
    norm = jnp.sqrt(jnp.sum(xf * xf, axis=1, keepdims=True))
    return (xf / (norm + eps)).astype(x.dtype)


if __name__ == "__main__":
    key = jax.random.PRNGKey(0)

    # Primary NCHW feature-map test.
    B, C, H, W = 2, 4, 16, 16
    x = jax.random.normal(key, (B, C, H, W), dtype=jnp.float32)
    y = jax.block_until_ready(l2n_pallas(x, eps=1e-6))
    assert y.shape == (B, C, H, W)
    assert jnp.allclose(y, l2n_reference(x), atol=1e-5, rtol=1e-5)

    # Non-128-divisible spatial size (7x7 = 49): full-row block, no pad pass.
    x2 = jax.random.normal(jax.random.PRNGKey(1), (2, 8, 7, 7), dtype=jnp.float32)
    y2 = jax.block_until_ready(l2n_pallas(x2))
    assert jnp.allclose(y2, l2n_reference(x2), atol=1e-5, rtol=1e-5)

    # Descriptor-shaped input (B, C, 1, 1): row-wise layout, C on lanes.
    x3 = jax.random.normal(jax.random.PRNGKey(2), (2, 256, 1, 1), dtype=jnp.float32)
    y3 = jax.block_until_ready(l2n_pallas(x3))
    assert jnp.allclose(y3, l2n_reference(x3), atol=1e-5, rtol=1e-5)

    # bf16 input: the scale is performed in f32 inside the kernel.
    xb = jax.random.normal(jax.random.PRNGKey(3), (2, 4, 16, 16), dtype=jnp.bfloat16)
    yb = jax.block_until_ready(l2n_pallas(xb))
    assert jnp.allclose(yb.astype(jnp.float32),
                        l2n_reference(xb).astype(jnp.float32),
                        atol=2e-2, rtol=2e-2)

    print("KERNEL_OK")
</pallas_src>

<mosaic_0001>
module attributes {stable_mosaic.version = 11 : i64} {
  func.func @kernel(%arg0: i32, %arg1: i32, %arg2: memref<1x4x128xf32, #tpu.memory_space<vmem>>, %arg3: memref<1x4x128xf32, #tpu.memory_space<vmem>>) attributes {dimension_semantics = [#tpu.dimension_semantics<parallel>, #tpu.dimension_semantics<parallel>], iteration_bounds = array<i64: 2, 2>, scalar_prefetch = 0 : i64, scratch_operands = 0 : i64, tpu.core_type = #tpu.core_type<tc>, window_params = [{transform_indices = @transform_0, window_bounds = array<i64: 1, 4, 128>}, {transform_indices = @transform_1, window_bounds = array<i64: 1, 4, 128>}]} {
    %c0 = arith.constant 0 : index
    %c0_0 = arith.constant 0 : index
    %c0_1 = arith.constant 0 : index
    %0 = vector.load %arg2[%c0, %c0_0, %c0_1] : memref<1x4x128xf32, #tpu.memory_space<vmem>>, vector<1x4x128xf32>
    %1 = arith.mulf %0, %0 : vector<1x4x128xf32>
    %cst = arith.constant dense<0.000000e+00> : vector<1x128xf32>
    %2 = vector.multi_reduction <add>, %1, %cst [1] : vector<1x4x128xf32> to vector<1x128xf32>
    %3 = vector.shape_cast %2 : vector<1x128xf32> to vector<1x1x128xf32>
    %4 = math.sqrt %3 : vector<1x1x128xf32>
    %cst_2 = arith.constant 9.99999997E-7 : f32
    %5 = vector.broadcast %cst_2 : f32 to vector<1x1x128xf32>
    %6 = arith.addf %4, %5 : vector<1x1x128xf32>
    %7 = tpu.reciprocal %6 : vector<1x1x128xf32> -> vector<1x1x128xf32>
    %8 = vector.broadcast %7 : vector<1x1x128xf32> to vector<1x4x128xf32>
    %9 = arith.mulf %0, %8 : vector<1x4x128xf32>
    %c0_3 = arith.constant 0 : index
    %c0_4 = arith.constant 0 : index
    %c0_5 = arith.constant 0 : index
    %10 = vector.load %arg3[%c0_3, %c0_4, %c0_5] : memref<1x4x128xf32, #tpu.memory_space<vmem>>, vector<1x4x128xf32>
    tpu.vector_store %arg3[%c0_3, %c0_4, %c0_5], %9 {strides = array<i32>} : memref<1x4x128xf32, #tpu.memory_space<vmem>>, vector<1x4x128xf32>,
    return
  }
  func.func @transform_0(%arg0: i32, %arg1: i32) -> (i32, i32, i32) {
    %c0_i32 = arith.constant 0 : i32
    %c0_i32_0 = arith.constant 0 : i32
    return %arg0, %c0_i32, %arg1 : i32, i32, i32
  }
  func.func @transform_1(%arg0: i32, %arg1: i32) -> (i32, i32, i32) {
    %c0_i32 = arith.constant 0 : i32
    %c0_i32_0 = arith.constant 0 : i32
    return %arg0, %c0_i32, %arg1 : i32, i32, i32
  }
}

</mosaic_0001>

<llo_original>
// kernel: tpu_custom_call.1
$region0: #{tpu_custom_call.1}
  #allocation0 [shape = 'u32[]', space=smem, size = 0x4, offset = 0x4, fixed_abs, tag = 'smem constant byte address 0x4 - core index']
  #allocation1 [shape = 'u32[144,128]{1,0:T(1,128)}', space=vmem, size = 0x12000, scoped, tag = 'internal scratch']
  %s0 = inlined_call_operand.hbm [shape: f32[2,4,256], index: 0, kind: input, shape index: {}]
  %s1 = inlined_call_operand.hbm [shape: f32[2,4,256], index: 1, kind: output, shape index: {}]
  %s2 = sld [smem:[#allocation0]]
  $region41: #{tpu_custom_call.1} parent=0
    _
  %s4 = ssub.s32 1, %s2
  %s5 = scalar_select 0, %s4, %s2
  $region1: #{tpu_custom_call.1} parent=0
    #allocation2 [shape = 'u8[4096]{0}', space=vmem, size = 0x1000, scoped, tag = 'input window, operand 0']
    #allocation3 [shape = 's32[2]{0}', space=sflag, size = 0x8, scoped, tag = 'scoped memory for tpu_custom_call.1']
    #allocation4 [shape = 's32[2]{0}', space=sflag, size = 0x8, scoped, tag = 'scoped memory for tpu_custom_call.1']
    #allocation5 [shape = 'u8[4096]{0}', space=vmem, size = 0x1000, scoped, tag = 'output window, operand 0']
    %6 = vsyncpa [#allocation3], 0
    %s7 = scalar_lea.sflag [#allocation3], 1
    %8 = vsyncpa %s7, 0
    %9 = vsyncpa [#allocation4], 0
    %s10 = scalar_lea.sflag [#allocation4], 1
    %11 = vsyncpa %s10, 0
    loop: start=0, step=1, limit=6
    $region2: #{tpu_custom_call.1} parent=1 // loop_pre_header
      _
    $region3: #{tpu_custom_call.1} parent=1 // loop_header
      %s13 = sphi 0, %s17
      %p14 = scmp.ge.s32.totalorder %s13, 6
      %s20 = sphi 0, %s32
      %s21 = sphi 0, %s28
      %s22 = sphi 0, %s20
      %s23 = sphi 0, %s21
      %s24 = sphi 0, %s22
      %s25 = sphi 0, %s23
      %s37 = sphi 0, %s39
      %s40 = sphi 0, %s37
      %s41 = sphi 0, %s40
      %s57 = sphi 0, %s41
      %s65 = sphi 0, %s67
      %s68 = sphi 0, %s65
      %s69 = sphi 0, %s68
      %s85 = sphi 0, %s69
    $region4: #{tpu_custom_call.1} parent=1 // loop_header_branch
      %16 = sbr.rel (%p14) target = $region8
    $region5: #{tpu_custom_call.1} parent=1 // loop_body
      %s18 = ssub.s32 %s13, 1
      %s19 = ssub.s32 %s13, 2
      %s26 = sadd.s32 1, %s21
      %p27 = scmp.ge.s32.totalorder %s26, 2
      %s28 = scalar_select %p27, 0, %s26
      %s29 = sadd.s32 1, %s20
      %s30 = scalar_select %p27, %s29, %s20
      %p31 = scmp.ge.s32.totalorder %s30, 2
      %s32 = scalar_select %p31, 0, %s30
      %s33 = ssub.s32 %s20, %s32
      %s34 = ssub.s32 %s21, %s28
      %s35 = sor.u32 %s33, %s34
      %p36 = scmp.eq.s32.totalorder %s35, 0
      %s38 = sadd.s32 %s37, 1
      %s39 = scalar_select %p36, %s37, %s38
      %p42 = pneg %p36
      %p43 = scmp.eq.s32.totalorder %s13, 3
      %p44 = por %p42, %p43
      %p45 = scmp.ne.s32.totalorder %s37, %s40
      %p46 = scmp.eq.s32.totalorder %s13, 0
      %p47 = por %p45, %p46
      %p48 = scmp.ne.s32.totalorder %s37, %s40
      %p49 = scmp.eq.s32.totalorder %s18, 3
      %p50 = por %p48, %p49
      %p51 = scmp.ne.s32.totalorder %s40, %s41
      %p52 = scmp.eq.s32.totalorder %s18, 0
      %p53 = por %p51, %p52
      %p54 = scmp.ne.s32.totalorder %s40, %s41
      %p55 = scmp.eq.s32.totalorder %s19, 3
      %p56 = por %p54, %p55
      %p58 = scmp.ne.s32.totalorder %s41, %s57
      %p59 = scmp.eq.s32.totalorder %s19, 0
      %p60 = por %p58, %p59
      %s61 = ssub.s32 %s20, %s32
      %s62 = ssub.s32 %s21, %s28
      %s63 = sor.u32 %s61, %s62
      %p64 = scmp.eq.s32.totalorder %s63, 0
      %s66 = sadd.s32 %s65, 1
      %s67 = scalar_select %p64, %s65, %s66
      %p70 = pneg %p64
      %p71 = scmp.eq.s32.totalorder %s13, 3
      %p72 = por %p70, %p71
      %p73 = scmp.ne.s32.totalorder %s65, %s68
      %p74 = scmp.eq.s32.totalorder %s13, 0
      %p75 = por %p73, %p74
      %p76 = scmp.ne.s32.totalorder %s65, %s68
      %p77 = scmp.eq.s32.totalorder %s18, 3
      %p78 = por %p76, %p77
      %p79 = scmp.ne.s32.totalorder %s68, %s69
      %p80 = scmp.eq.s32.totalorder %s18, 0
      %p81 = por %p79, %p80
      %p82 = scmp.ne.s32.totalorder %s68, %s69
      %p83 = scmp.eq.s32.totalorder %s19, 3
      %p84 = por %p82, %p83
      %p86 = scmp.ne.s32.totalorder %s69, %s85
      %p87 = scmp.eq.s32.totalorder %s19, 0
      %p88 = por %p86, %p87
      %p89 = scmp.le.s32.totalorder 1, %s13
      %p90 = scmp.lt.s32.totalorder %s13, 5
      %p91 = pnand %p89, %p90
      %p92 = pneg %p91
      // Predicated region
      $region9: #{tpu_custom_call.1} parent=5 // pred_check
        _
      $region10: #{tpu_custom_call.1} parent=5 // pred_check_branch
        %94 = sbr.rel (%p91) target = $region12
      $region11: #{tpu_custom_call.1} parent=5 // pred_region
        %s95 = ssub.s32 %s13, 1
      $region12: #{tpu_custom_call.1} parent=5 // pred_fallthru
        _
      %p96 = scmp.lt.s32.totalorder %s13, 4
      // Predicated region
      $region13: #{tpu_custom_call.1} parent=5 // pred_check
        %p97 = pneg %p96
      $region14: #{tpu_custom_call.1} parent=5 // pred_check_branch
        %99 = sbr.rel (%p97) target = $region16
      $region15: #{tpu_custom_call.1} parent=5 // pred_region
        // Predicated region
        $region17: #{tpu_custom_call.1} parent=15 // pred_check
          %p100 = pneg %p47
        $region18: #{tpu_custom_call.1} parent=15 // pred_check_branch
          %102 = sbr.rel (%p100) target = $region20
        $region19: #{tpu_custom_call.1} parent=15 // pred_region
          %s103 = sand.u32 %s37, 1
          %s104 = scalar_lea.sflag [#allocation3], %s103
          %s105 = sand.u32 %s37, 1
          %s106 = smul.addr %s105, 4
          %s107 = scalar_lea.vmem [#allocation2], %s106
          %s109 = ssub.s32 64, 64
          %110 = vsyncadd %s104, %s109
          %s111 = smul.addr %s20, 2
          %s112 = sadd.s32 %s21, %s111
          %s113 = smul.addr %s112, 64
          %s114 = scalar_lea.hbm %s0, %s113
          %s116 = sshll.u32 %s107, 4
          %s117 = int_to_ptr.vmem [resolvable:$true] %s116
          %119 = dma.hbm_to_vmem [thread:$0]  %s114, 64, %s117, %s104
        $region20: #{tpu_custom_call.1} parent=15 // pred_fallthru
          _
      $region16: #{tpu_custom_call.1} parent=5 // pred_fallthru
        _
      %p120 = scmp.le.s32.totalorder 1, %s13
      %p121 = scmp.lt.s32.totalorder %s13, 5
      %p122 = pnand %p120, %p121
      %p123 = pneg %p122
      // Predicated region
      $region21: #{tpu_custom_call.1} parent=5 // pred_check
        _
      $region22: #{tpu_custom_call.1} parent=5 // pred_check_branch
        %125 = sbr.rel (%p122) target = $region24
      $region23: #{tpu_custom_call.1} parent=5 // pred_region
        %s126 = ssub.s32 %s13, 1
        %s127 = sand.u32 %s40, 1
        %s128 = scalar_lea.sflag [#allocation3], %s127
        %s129 = sand.u32 %s40, 1
        %s130 = smul.addr %s129, 4
        %s131 = scalar_lea.vmem [#allocation2], %s130
        // Predicated region
        $region25: #{tpu_custom_call.1} parent=23 // pred_check
          %p132 = pneg %p53
        $region26: #{tpu_custom_call.1} parent=23 // pred_check_branch
          %134 = sbr.rel (%p132) target = $region28
        $region27: #{tpu_custom_call.1} parent=23 // pred_region
          %135 = dma.done %s128, 64
        $region28: #{tpu_custom_call.1} parent=23 // pred_fallthru
          _
        %s136 = sand.u32 %s40, 1
        %s137 = scalar_lea.sflag [#allocation3], %s136
        %s138 = sand.u32 %s40, 1
        %s139 = smul.addr %s138, 4
        %s140 = scalar_lea.vmem [#allocation2], %s139
        %p141 = pneg %p53
        %p142 = pneg %p50
        %p143 = pneg %p81
        %p144 = pneg %p78
        %s145 = sand.u32 %s68, 1
        %s146 = scalar_lea.sflag [#allocation4], %s145
        %s147 = sand.u32 %s68, 1
        %s148 = smul.addr %s147, 4
        %s149 = scalar_lea.vmem [#allocation5], %s148
        %v150 = vld [vmem:[%s131] sm:$0xf]
        %v151 = vmul.f32 %v150, %v150
        %vm152 = vcmask 1043456
        %v153 = vsel %vm152, %v151, 0.0
        %v154 = vrot.slane %v153, 4
        %v155 = vadd.f32 %v153, %v154
        %v156 = vrot.slane %v155, 2
        %v157 = vadd.f32 %v155, %v156
        %v158 = vrot.slane %v157, 1
        %v159 = vadd.f32 %v157, %v158
        %v160 = vrsqrt.pop %v159
        %v161 = vmul.f32 %v159, %v160
        %vm162 = vcmp.eq.f32.partialorder %v159, inf
        %v163 = vsel %vm162, %v159, %v161
        %vm164 = vcmp.eq.f32.partialorder %v159, 0.0
        %v165 = vand.u32 %v159, 2147483648
        %v166 = vsel %vm164, %v165, %v163
        %v167 = vadd.f32 %v166, 1e-06
        %v168 = vrcp.pop %v167
        %v169 = vmul.f32 %v150, %v168
        %170 = vst [vmem:[%s149] sm:$0xf] %v169
        %s171 = sand.u32 %s68, 1
        %s172 = scalar_lea.sflag [#allocation4], %s171
        %s173 = sand.u32 %s68, 1
        %s174 = smul.addr %s173, 4
        %s175 = scalar_lea.vmem [#allocation5], %s174
        // Predicated region
        $region29: #{tpu_custom_call.1} parent=23 // pred_check
          %p176 = pneg %p78
        $region30: #{tpu_custom_call.1} parent=23 // pred_check_branch
          %178 = sbr.rel (%p176) target = $region32
        $region31: #{tpu_custom_call.1} parent=23 // pred_region
          %s180 = ssub.s32 64, 64
          %181 = vsyncadd %s172, %s180
          %s182 = smul.addr %s22, 2
          %s183 = sadd.s32 %s23, %s182
          %s184 = smul.addr %s183, 64
          %s185 = scalar_lea.hbm %s1, %s184
          %s187 = sshll.u32 %s175, 4
          %s188 = int_to_ptr.vmem [resolvable:$true] %s187
          %190 = dma.vmem_to_hbm [thread:$0]  %s188, 64, %s185, %s172
        $region32: #{tpu_custom_call.1} parent=23 // pred_fallthru
          _
      $region24: #{tpu_custom_call.1} parent=5 // pred_fallthru
        _
      %p191 = scmp.le.s32.totalorder 2, %s13
      // Predicated region
      $region33: #{tpu_custom_call.1} parent=5 // pred_check
        %p192 = pneg %p191
      $region34: #{tpu_custom_call.1} parent=5 // pred_check_branch
        %194 = sbr.rel (%p192) target = $region36
      $region35: #{tpu_custom_call.1} parent=5 // pred_region
        %s195 = ssub.s32 %s13, 2
        // Predicated region
        $region37: #{tpu_custom_call.1} parent=35 // pred_check
          %p196 = pneg %p84
        $region38: #{tpu_custom_call.1} parent=35 // pred_check_branch
          %198 = sbr.rel (%p196) target = $region40
        $region39: #{tpu_custom_call.1} parent=35 // pred_region
          %s199 = sand.u32 %s69, 1
          %s200 = scalar_lea.sflag [#allocation4], %s199
          %s201 = sand.u32 %s69, 1
          %s202 = smul.addr %s201, 4
          %s203 = scalar_lea.vmem [#allocation5], %s202
          %204 = dma.done %s200, 64
        $region40: #{tpu_custom_call.1} parent=35 // pred_fallthru
          _
      $region36: #{tpu_custom_call.1} parent=5 // pred_fallthru
        _
    $region6: #{tpu_custom_call.1} parent=1 // loop_footer
      %s17 = sadd.s32 1, %s13
    $region7: #{tpu_custom_call.1} parent=1 // loop_footer_branch
      %12 = sbr.rel target = $region3
    $region8: #{tpu_custom_call.1} parent=1 // loop_exit
      _
    %205 = vsyncpa [#allocation3], 1
    %s206 = scalar_lea.sflag [#allocation3], 1
    %207 = vsyncpa %s206, 1
    %208 = vsyncpa [#allocation4], 1
    %s209 = scalar_lea.sflag [#allocation4], 1
    %210 = vsyncpa %s209, 1

</llo_original>
